<compile_context>
chip_gen: v7x
topology: tpu7x:2x2x1
jax: 0.10.0
libtpu: 0.0.40
codegen_flags: <defaults>
</compile_context>

<pallas_src>
import functools

import jax
import jax.numpy as jnp
from jax import lax
from jax.experimental import pallas as pl
from jax.experimental.pallas import tpu as pltpu


# ---------------------------------------------------------------------------
# Pre-pass kernel: fused q / k / v / ones projection (the 1x1 convs), done once
# per (batch, spatial tile) instead of once per (Q-tile, KV-tile).
# ---------------------------------------------------------------------------
def _project_kernel(x_ref, w_ref, b_ref, q_ref, kv_ref, *, cqp):
    x = x_ref[0]                                           # (C, T)
    if x.dtype != w_ref.dtype:
        x = x.astype(w_ref.dtype)
    proj = (jnp.dot(w_ref[...], x, preferred_element_type=jnp.float32)
            + b_ref[...])                                  # (2*cqp + C + 1, T) f32
    q_ref[0] = proj[:cqp].astype(q_ref.dtype)              # (cqp, T)
    kv_ref[0] = proj[cqp:].astype(kv_ref.dtype)            # (cqp + C + 1, T)


# ---------------------------------------------------------------------------
# Main kernel: flash-style online softmax over a tiled KV axis, channels-major
# (C, N) layout so N sits on the 128-lane axis for every matmul and store.
# ---------------------------------------------------------------------------
def _flash_attn_kernel(cqp, C, gamma_ref, xq_ref, q_ref, kv_ref, o_ref,
                       m_scr, accl_scr):
    ki = pl.program_id(2)

    @pl.when(ki == 0)
    def _():
        m_scr[...] = jnp.full_like(m_scr, -jnp.inf)
        accl_scr[...] = jnp.zeros_like(accl_scr)

    q = q_ref[0]                                   # (cqp, TQ)        mxu dtype
    kv = kv_ref[0]                                 # (cqp + C + 1, TKV)
    k = kv[:cqp, :]                                # (cqp, TKV)
    v_aug = kv[cqp:, :]                            # (C + 1, TKV), last row == 1

    # energy^T tile: eT[j, i] = <k_j, q_i>.  Contract axis 0 of both operands
    # directly so Mosaic feeds the MXU a transposed operand (no vxpose of k).
    eT = lax.dot_general(k, q, (((0,), (0,)), ((), ())),
                         preferred_element_type=jnp.float32)        # (TKV, TQ)

    m_prev = m_scr[...]                                             # (1, TQ)
    m_new = jnp.maximum(m_prev, jnp.max(eT, axis=0, keepdims=True))
    alpha = jnp.exp(m_prev - m_new)                                 # (1, TQ)
    p = jnp.exp(eT - m_new)                                         # (TKV, TQ) f32

    # One MXU push produces both the (C, TQ) value accumulator and the (1, TQ)
    # softmax denominator (via the constant-1 row of v_aug) -> no XLU sum of p.
    accl_scr[...] = alpha * accl_scr[...] + jnp.dot(
        v_aug, p.astype(v_aug.dtype), preferred_element_type=jnp.float32)
    m_scr[...] = m_new

    @pl.when(ki == pl.num_programs(2) - 1)
    def _():
        accl = accl_scr[...]                       # (C + 1, TQ) f32
        l = accl[C:C + 1, :]                       # (1, TQ) softmax denominator
        inv_l = pl.reciprocal(l, approx=True)      # EUP slot
        inv_l = inv_l * (2.0 - l * inv_l)          # one Newton step (epilogue-only)
        out = accl[:C, :] * inv_l                  # (C, TQ)
        o_ref[0] = (gamma_ref[0] * out + xq_ref[0]).astype(o_ref.dtype)


# ---------------------------------------------------------------------------
# Tile / VMEM budgeting helpers (generation-aware).
# ---------------------------------------------------------------------------
_TILE_CANDIDATES = (2048, 1024, 512, 256, 128)


def _vmem_capacity_bytes():
    try:
        cap = getattr(pltpu.get_tpu_info(), "vmem_capacity_bytes", None)
        if cap:
            return int(cap)
    except Exception:
        pass
    return 64 * 1024 * 1024        # conservative fallback: v7x per-TC VMEM


def _tile_candidates(n):
    cands = [t for t in _TILE_CANDIDATES if t <= n and n % t == 0]
    return cands or [n]            # odd / small N: single full-extent tile


def _flash_vmem_estimate(C, cqp, tq, tkv, item):
    f32 = 4
    return (2 * C * tq * f32                   # residual x tile (double-buffered)
            + 2 * cqp * tq * item              # q tile
            + 2 * (cqp + C + 1) * tkv * item   # k/v/ones tile
            + 2 * C * tq * f32                 # output tile
            + (C + 2) * tq * f32               # accl + m scratch
            + tq * tkv * (f32 + item))         # eT (f32) + p (mxu dtype)


def _select_flash_tiles(N, C, cqp, item, budget, max_p_bytes=8 << 20):
    cands = _tile_candidates(N)
    pairs = sorted(((tq, tkv) for tq in cands for tkv in cands),
                   key=lambda p: (p[0] * p[1], p[0]), reverse=True)
    for tq, tkv in pairs:
        if tq * tkv * 4 > max_p_bytes:         # keep the (TKV,TQ) tile a few MiB
            continue
        if _flash_vmem_estimate(C, cqp, tq, tkv, item) <= budget:
            return tq, tkv
    return pairs[-1]


def _select_proj_tile(N, C, cqp, item, budget):
    rows = 2 * cqp + C + 1
    cands = _tile_candidates(N)
    for t in cands:
        est = (2 * C * t * 4                   # x tiles
               + 2 * rows * t * item           # q / kv output tiles
               + rows * t * 4                  # f32 projection intermediate
               + 2 * rows * C * item)          # resident fused weights
        if est <= budget:
            return t
    return cands[-1]


# ---------------------------------------------------------------------------
# Wrapper.
# ---------------------------------------------------------------------------
def self_attention_pallas(x_nchw, params, *, tq=None, tkv=None,
                          mxu_dtype=jnp.bfloat16):
    B, C, W, H = x_nchw.shape
    N = W * H
    Cq = params["wq"].shape[0]                       # C // 8

    item = jnp.dtype(mxu_dtype).itemsize
    pack = 16 if item == 2 else 8                    # bf16 packs 16 sublanes/vreg
    cqp = max(pack, ((Cq + pack - 1) // pack) * pack)

    f32 = jnp.float32
    # channels-major, lane-dense layout: (B, C, N)  (pure reshape, no transpose)
    x = x_nchw.reshape(B, C, N).astype(f32)

    def pad_rows(w, rows):
        w = w.astype(f32)
        return jnp.pad(w, ((0, rows - w.shape[0]), (0, 0)))

    def pad_col(b, rows):
        b = b.astype(f32)
        return jnp.pad(b, (0, rows - b.shape[0])).reshape(rows, 1)

    # Fused projection: rows [0:cqp)=q, [cqp:2cqp)=k, [2cqp:2cqp+C)=v, last row
    # = ones (zero weights, bias 1) -> softmax denominator comes from the MXU.
    # Padded q/k rows have zero weight & bias, so they contribute 0 to q.k.
    w_all = jnp.concatenate(
        [pad_rows(params["wq"], cqp), pad_rows(params["wk"], cqp),
         params["wv"].astype(f32), jnp.zeros((1, C), f32)], axis=0)
    b_all = jnp.concatenate(
        [pad_col(params["bq"], cqp), pad_col(params["bk"], cqp),
         params["bv"].astype(f32).reshape(C, 1), jnp.ones((1, 1), f32)], axis=0)

    gamma = params["gamma"].reshape(1).astype(f32)

    # Generation-aware VMEM budgeting: 128 MiB on v5e/v6e, 64 MiB per TC on v7x.
    vmem_cap = _vmem_capacity_bytes()
    budget = int(vmem_cap * 0.45)                    # tiles + intermediates
    vmem_limit = int(vmem_cap * 0.75)                # explicit scoped limit

    if tq is None or tkv is None:
        auto_tq, auto_tkv = _select_flash_tiles(N, C, cqp, item, budget)
        tq = tq or auto_tq
        tkv = tkv or auto_tkv
    assert N % tq == 0 and N % tkv == 0, "N = W*H must be divisible by the tiles"
    tproj = _select_proj_tile(N, C, cqp, item, budget)

    kv_rows = cqp + C + 1
    w_rows = 2 * cqp + C + 1

    # --- pre-pass: fused q/k/v(/ones) 1x1-conv projection ---------------------
    q_proj, kv_aug = pl.pallas_call(
        functools.partial(_project_kernel, cqp=cqp),
        out_shape=(jax.ShapeDtypeStruct((B, cqp, N), mxu_dtype),
                   jax.ShapeDtypeStruct((B, kv_rows, N), mxu_dtype)),
        grid_spec=pltpu.PrefetchScalarGridSpec(
            num_scalar_prefetch=0,
            grid=(B, N // tproj),
            in_specs=[
                pl.BlockSpec((1, C, tproj), lambda b, i: (b, 0, i)),   # x tile
                pl.BlockSpec((w_rows, C),   lambda b, i: (0, 0)),      # fused W
                pl.BlockSpec((w_rows, 1),   lambda b, i: (0, 0)),      # fused b
            ],
            out_specs=(
                pl.BlockSpec((1, cqp, tproj),     lambda b, i: (b, 0, i)),
                pl.BlockSpec((1, kv_rows, tproj), lambda b, i: (b, 0, i)),
            ),
        ),
        compiler_params=pltpu.CompilerParams(
            dimension_semantics=("parallel", "parallel"),
            vmem_limit_bytes=vmem_limit),
    )(x, w_all.astype(mxu_dtype), b_all)

    # --- flash attention over the tiled KV axis --------------------------------
    grid = (B, N // tq, N // tkv)                    # KV (reduction) axis last

    out = pl.pallas_call(
        functools.partial(_flash_attn_kernel, cqp, C),
        out_shape=jax.ShapeDtypeStruct((B, C, N), jnp.float32),
        grid_spec=pltpu.PrefetchScalarGridSpec(
            num_scalar_prefetch=0,
            grid=grid,
            in_specs=[
                pl.BlockSpec(memory_space=pltpu.SMEM),                         # gamma
                pl.BlockSpec((1, C, tq),        lambda b, qi, ki: (b, 0, qi)), # x residual
                pl.BlockSpec((1, cqp, tq),      lambda b, qi, ki: (b, 0, qi)), # q tile
                pl.BlockSpec((1, kv_rows, tkv), lambda b, qi, ki: (b, 0, ki)), # k/v/ones
            ],
            out_specs=pl.BlockSpec((1, C, tq), lambda b, qi, ki: (b, 0, qi)),
            scratch_shapes=[
                pltpu.VMEM((1, tq), jnp.float32),        # running max m
                pltpu.VMEM((C + 1, tq), jnp.float32),    # [value acc ; softmax sum]
            ],
        ),
        compiler_params=pltpu.CompilerParams(
            # B and the Q-tile axes are "parallel" so v7x megacore can shard the
            # grid across both TensorCores; KV axis is the resident reduction.
            dimension_semantics=("parallel", "parallel", "arbitrary"),
            vmem_limit_bytes=vmem_limit),
    )(gamma, x, q_proj, kv_aug)

    return out.reshape(B, C, W, H)


def self_attention_reference(x, params):
    """Pure-JAX reference matching the PyTorch forward exactly (f32)."""
    B, C, W, H = x.shape
    N = W * H

    def conv1x1(xx, w, b):
        return jnp.einsum('bchw,oc->bohw', xx, w) + b[None, :, None, None]

    q = conv1x1(x, params["wq"], params["bq"]).reshape(B, -1, N).transpose(0, 2, 1)
    k = conv1x1(x, params["wk"], params["bk"]).reshape(B, -1, N)
    v = conv1x1(x, params["wv"], params["bv"]).reshape(B, -1, N)
    energy = jnp.einsum('bnc,bcm->bnm', q, k)
    attn = jax.nn.softmax(energy, axis=-1)
    out = jnp.einsum('bcn,bmn->bcm', v, attn).reshape(B, C, W, H)
    return params["gamma"] * out + x


if __name__ == "__main__":
    B, C, W, H = 2, 32, 16, 16            # C // 8 == 4, N == 256
    key = jax.random.PRNGKey(0)
    kx, kq, kk, kvk, kbq, kbk, kbv = jax.random.split(key, 7)

    x = jax.random.normal(kx, (B, C, W, H), dtype=jnp.float32)

    # Deterministic synthetic parameters (Conv2d 1x1 weights stored as (Cout, Cin)).
    # NOTE: the PyTorch __init__ sets gamma = 0; a nonzero value is used here so
    # the attention path actually contributes to the checked output.
    params = {
        "wq": 0.1 * jax.random.normal(kq, (C // 8, C), dtype=jnp.float32),
        "bq": 0.1 * jax.random.normal(kbq, (C // 8,), dtype=jnp.float32),
        "wk": 0.1 * jax.random.normal(kk, (C // 8, C), dtype=jnp.float32),
        "bk": 0.1 * jax.random.normal(kbk, (C // 8,), dtype=jnp.float32),
        "wv": 0.1 * jax.random.normal(kvk, (C, C), dtype=jnp.float32),
        "bv": 0.1 * jax.random.normal(kbv, (C,), dtype=jnp.float32),
        "gamma": jnp.array(0.5, dtype=jnp.float32),
    }

    out = self_attention_pallas(x, params)           # bf16 MXU operands, f32 acc
    out = jax.block_until_ready(out)

    ref = self_attention_reference(x, params)
    assert out.shape == (B, C, W, H)
    # tolerance covers bf16 MXU operands (softmax / accumulation stay in f32)
    assert jnp.allclose(out, ref, atol=1e-2, rtol=1e-2), "mismatch vs reference"

    print("KERNEL_OK")
</pallas_src>

<mosaic_0001>
module attributes {stable_mosaic.version = 11 : i64} {
  func.func @_project_kernel(%arg0: i32, %arg1: i32, %arg2: memref<1x32x256xf32, #tpu.memory_space<vmem>>, %arg3: memref<65x32xbf16, #tpu.memory_space<vmem>>, %arg4: memref<65x1xf32, #tpu.memory_space<vmem>>, %arg5: memref<1x16x256xbf16, #tpu.memory_space<vmem>>, %arg6: memref<1x49x256xbf16, #tpu.memory_space<vmem>>) attributes {dimension_semantics = [#tpu.dimension_semantics<parallel>, #tpu.dimension_semantics<parallel>], iteration_bounds = array<i64: 2, 1>, scalar_prefetch = 0 : i64, scratch_operands = 0 : i64, tpu.core_type = #tpu.core_type<tc>, window_params = [{transform_indices = @transform_0, window_bounds = array<i64: 1, 32, 256>}, {pipeline_mode = #tpu.pipeline_mode<synchronous>, transform_indices = @transform_1, window_bounds = array<i64: 65, 32>}, {pipeline_mode = #tpu.pipeline_mode<synchronous>, transform_indices = @transform_2, window_bounds = array<i64: 65, 1>}, {transform_indices = @transform_3, window_bounds = array<i64: 1, 16, 256>}, {transform_indices = @transform_4, window_bounds = array<i64: 1, 49, 256>}]} {
    %c0 = arith.constant 0 : index
    %c0_0 = arith.constant 0 : index
    %c0_1 = arith.constant 0 : index
    %0 = vector.load %arg2[%c0, %c0_0, %c0_1] : memref<1x32x256xf32, #tpu.memory_space<vmem>>, vector<1x32x256xf32>
    %1 = vector.shape_cast %0 : vector<1x32x256xf32> to vector<32x256xf32>
    %2 = arith.truncf %1 : vector<32x256xf32> to vector<32x256xbf16>
    %c0_2 = arith.constant 0 : index
    %c0_3 = arith.constant 0 : index
    %3 = vector.load %arg3[%c0_2, %c0_3] : memref<65x32xbf16, #tpu.memory_space<vmem>>, vector<65x32xbf16>
    %cst = arith.constant dense<0.000000e+00> : vector<65x256xf32>
    %4 = tpu.matmul %3, %2, %cst {dimension_numbers = #tpu.dot_dimension_numbers<[1], [0], [0], [1], [0, 0, 1, 1], [], []>} : vector<65x32xbf16>, vector<32x256xbf16>, vector<65x256xf32> -> vector<65x256xf32>
    %c0_4 = arith.constant 0 : index
    %c0_5 = arith.constant 0 : index
    %5 = vector.load %arg4[%c0_4, %c0_5] : memref<65x1xf32, #tpu.memory_space<vmem>>, vector<65x1xf32>
    %6 = vector.broadcast %5 : vector<65x1xf32> to vector<65x256xf32>
    %7 = arith.addf %4, %6 : vector<65x256xf32>
    %8 = vector.extract_strided_slice %7 {offsets = [0, 0], sizes = [16, 256], strides = [1, 1]} : vector<65x256xf32> to vector<16x256xf32>
    %9 = arith.truncf %8 : vector<16x256xf32> to vector<16x256xbf16>
    %c0_6 = arith.constant 0 : index
    %c0_7 = arith.constant 0 : index
    %c0_8 = arith.constant 0 : index
    %10 = vector.load %arg5[%c0_6, %c0_7, %c0_8] : memref<1x16x256xbf16, #tpu.memory_space<vmem>>, vector<1x16x256xbf16>
    %11 = vector.shape_cast %10 : vector<1x16x256xbf16> to vector<16x256xbf16>
    %12 = vector.shape_cast %9 : vector<16x256xbf16> to vector<1x16x256xbf16>
    tpu.vector_store %arg5[%c0_6, %c0_7, %c0_8], %12 {strides = array<i32>} : memref<1x16x256xbf16, #tpu.memory_space<vmem>>, vector<1x16x256xbf16>,
    %13 = vector.extract_strided_slice %7 {offsets = [16, 0], sizes = [49, 256], strides = [1, 1]} : vector<65x256xf32> to vector<49x256xf32>
    %14 = arith.truncf %13 : vector<49x256xf32> to vector<49x256xbf16>
    %c0_9 = arith.constant 0 : index
    %c0_10 = arith.constant 0 : index
    %c0_11 = arith.constant 0 : index
    %15 = vector.load %arg6[%c0_9, %c0_10, %c0_11] : memref<1x49x256xbf16, #tpu.memory_space<vmem>>, vector<1x49x256xbf16>
    %16 = vector.shape_cast %15 : vector<1x49x256xbf16> to vector<49x256xbf16>
    %17 = vector.shape_cast %14 : vector<49x256xbf16> to vector<1x49x256xbf16>
    tpu.vector_store %arg6[%c0_9, %c0_10, %c0_11], %17 {strides = array<i32>} : memref<1x49x256xbf16, #tpu.memory_space<vmem>>, vector<1x49x256xbf16>,
    return
  }
  func.func @transform_0(%arg0: i32, %arg1: i32) -> (i32, i32, i32) {
    %c0_i32 = arith.constant 0 : i32
    %c0_i32_0 = arith.constant 0 : i32
    return %arg0, %c0_i32, %arg1 : i32, i32, i32
  }
  func.func @transform_1(%arg0: i32, %arg1: i32) -> (i32, i32) {
    %c0_i32 = arith.constant 0 : i32
    %c0_i32_0 = arith.constant 0 : i32
    %c0_i32_1 = arith.constant 0 : i32
    return %c0_i32, %c0_i32_0 : i32, i32
  }
  func.func @transform_2(%arg0: i32, %arg1: i32) -> (i32, i32) {
    %c0_i32 = arith.constant 0 : i32
    %c0_i32_0 = arith.constant 0 : i32
    %c0_i32_1 = arith.constant 0 : i32
    return %c0_i32, %c0_i32_0 : i32, i32
  }
  func.func @transform_3(%arg0: i32, %arg1: i32) -> (i32, i32, i32) {
    %c0_i32 = arith.constant 0 : i32
    %c0_i32_0 = arith.constant 0 : i32
    return %arg0, %c0_i32, %arg1 : i32, i32, i32
  }
  func.func @transform_4(%arg0: i32, %arg1: i32) -> (i32, i32, i32) {
    %c0_i32 = arith.constant 0 : i32
    %c0_i32_0 = arith.constant 0 : i32
    return %arg0, %c0_i32, %arg1 : i32, i32, i32
  }
}

</mosaic_0001>

<llo_original>
// kernel: tpu_custom_call.1
$region0: #{tpu_custom_call.1}
  #allocation0 [shape = 'u32[]', space=smem, size = 0x4, offset = 0x4, fixed_abs, tag = 'smem constant byte address 0x4 - core index']
  #allocation1 [shape = 'u32[144,128]{1,0:T(1,128)}', space=vmem, size = 0x12000, scoped, tag = 'internal scratch']
  %s0 = inlined_call_operand.hbm [shape: f32[2,32,256], index: 0, kind: input, shape index: {}]
  %s1 = inlined_call_operand.vmem [shape: bf16[65,32], index: 1, kind: input, shape index: {}]
  %s2 = inlined_call_operand.vmem [shape: f32[65,1], index: 2, kind: input, shape index: {}]
  %s3 = inlined_call_operand.hbm [shape: bf16[2,16,256], index: 3, kind: output, shape index: {0}]
  %s4 = inlined_call_operand.vmem [shape: bf16[2,49,256], index: 4, kind: output, shape index: {1}]
  %5 = xla_tuple %s3, %s4
  %s6 = sld [smem:[#allocation0]]
  $region57: #{tpu_custom_call.1} parent=0
    _
  %s8 = ssub.s32 1, %s6
  %s9 = scalar_select 0, %s8, %s6
  $region1: #{tpu_custom_call.1} parent=0
    #allocation2 [shape = 'u8[65536]{0}', space=vmem, size = 0x10000, scoped, tag = 'input window, operand 0']
    #allocation3 [shape = 's32[2]{0}', space=sflag, size = 0x8, scoped, tag = 'scoped memory for tpu_custom_call.1']
    #allocation4 [shape = 's32[2]{0}', space=sflag, size = 0x8, scoped, tag = 'scoped memory for tpu_custom_call.1']
    #allocation5 [shape = 'u8[16384]{0}', space=vmem, size = 0x4000, scoped, tag = 'output window, operand 0']
    %10 = vsyncpa [#allocation3], 0
    %s11 = scalar_lea.sflag [#allocation3], 1
    %12 = vsyncpa %s11, 0
    %13 = vsyncpa [#allocation4], 0
    %s14 = scalar_lea.sflag [#allocation4], 1
    %15 = vsyncpa %s14, 0
    loop: start=0, step=1, limit=4
    $region2: #{tpu_custom_call.1} parent=1 // loop_pre_header
      _
    $region3: #{tpu_custom_call.1} parent=1 // loop_header
      %s17 = sphi 0, %s21
      %p18 = scmp.ge.s32.totalorder %s17, 4
      %s24 = sphi 0, %s36
      %s25 = sphi 0, %s32
      %s26 = sphi 0, %s24
      %s27 = sphi 0, %s25
      %s28 = sphi 0, %s26
      %s29 = sphi 0, %s27
      %s41 = sphi 0, %s43
      %s44 = sphi 0, %s41
      %s45 = sphi 0, %s44
      %s61 = sphi 0, %s45
      %s65 = sphi 0, %s65
      %s67 = sphi 0, %s65
      %s68 = sphi 0, %s67
      %s82 = sphi 0, %s68
      %s86 = sphi 0, %s86
      %s88 = sphi 0, %s86
      %s89 = sphi 0, %s88
      %s103 = sphi 0, %s89
      %s111 = sphi 0, %s113
      %s114 = sphi 0, %s111
      %s115 = sphi 0, %s114
      %s131 = sphi 0, %s115
      %s139 = sphi 0, %s141
      %s142 = sphi 0, %s139
      %s143 = sphi 0, %s142
      %s159 = sphi 0, %s143
    $region4: #{tpu_custom_call.1} parent=1 // loop_header_branch
      %20 = sbr.rel (%p18) target = $region8
    $region5: #{tpu_custom_call.1} parent=1 // loop_body
      %s22 = ssub.s32 %s17, 1
      %s23 = ssub.s32 %s17, 2
      %s30 = sadd.s32 1, %s25
      %p31 = scmp.ge.s32.totalorder %s30, 1
      %s32 = scalar_select %p31, 0, %s30
      %s33 = sadd.s32 1, %s24
      %s34 = scalar_select %p31, %s33, %s24
      %p35 = scmp.ge.s32.totalorder %s34, 2
      %s36 = scalar_select %p35, 0, %s34
      %s37 = ssub.s32 %s24, %s36
      %s38 = ssub.s32 %s25, %s32
      %s39 = sor.u32 %s37, %s38
      %p40 = scmp.eq.s32.totalorder %s39, 0
      %s42 = sadd.s32 %s41, 1
      %s43 = scalar_select %p40, %s41, %s42
      %p46 = pneg %p40
      %p47 = scmp.eq.s32.totalorder %s17, 1
      %p48 = por %p46, %p47
      %p49 = scmp.ne.s32.totalorder %s41, %s44
      %p50 = scmp.eq.s32.totalorder %s17, 0
      %p51 = por %p49, %p50
      %p52 = scmp.ne.s32.totalorder %s41, %s44
      %p53 = scmp.eq.s32.totalorder %s22, 1
      %p54 = por %p52, %p53
      %p55 = scmp.ne.s32.totalorder %s44, %s45
      %p56 = scmp.eq.s32.totalorder %s22, 0
      %p57 = por %p55, %p56
      %p58 = scmp.ne.s32.totalorder %s44, %s45
      %p59 = scmp.eq.s32.totalorder %s23, 1
      %p60 = por %p58, %p59
      %p62 = scmp.ne.s32.totalorder %s45, %s61
      %p63 = scmp.eq.s32.totalorder %s23, 0
      %p64 = por %p62, %p63
      %s66 = sadd.s32 %s65, 1
      %p69 = scmp.eq.s32.totalorder %s17, 1
      %p70 = scmp.ne.s32.totalorder %s65, %s67
      %p71 = scmp.eq.s32.totalorder %s17, 0
      %p72 = por %p70, %p71
      %p73 = scmp.ne.s32.totalorder %s65, %s67
      %p74 = scmp.eq.s32.totalorder %s22, 1
      %p75 = por %p73, %p74
      %p76 = scmp.ne.s32.totalorder %s67, %s68
      %p77 = scmp.eq.s32.totalorder %s22, 0
      %p78 = por %p76, %p77
      %p79 = scmp.ne.s32.totalorder %s67, %s68
      %p80 = scmp.eq.s32.totalorder %s23, 1
      %p81 = por %p79, %p80
      %p83 = scmp.ne.s32.totalorder %s68, %s82
      %p84 = scmp.eq.s32.totalorder %s23, 0
      %p85 = por %p83, %p84
      %s87 = sadd.s32 %s86, 1
      %p90 = scmp.eq.s32.totalorder %s17, 1
      %p91 = scmp.ne.s32.totalorder %s86, %s88
      %p92 = scmp.eq.s32.totalorder %s17, 0
      %p93 = por %p91, %p92
      %p94 = scmp.ne.s32.totalorder %s86, %s88
      %p95 = scmp.eq.s32.totalorder %s22, 1
      %p96 = por %p94, %p95
      %p97 = scmp.ne.s32.totalorder %s88, %s89
      %p98 = scmp.eq.s32.totalorder %s22, 0
      %p99 = por %p97, %p98
      %p100 = scmp.ne.s32.totalorder %s88, %s89
      %p101 = scmp.eq.s32.totalorder %s23, 1
      %p102 = por %p100, %p101
      %p104 = scmp.ne.s32.totalorder %s89, %s103
      %p105 = scmp.eq.s32.totalorder %s23, 0
      %p106 = por %p104, %p105
      %s107 = ssub.s32 %s24, %s36
      %s108 = ssub.s32 %s25, %s32
      %s109 = sor.u32 %s107, %s108
      %p110 = scmp.eq.s32.totalorder %s109, 0
      %s112 = sadd.s32 %s111, 1
      %s113 = scalar_select %p110, %s111, %s112
      %p116 = pneg %p110
      %p117 = scmp.eq.s32.totalorder %s17, 1
      %p118 = por %p116, %p117
      %p119 = scmp.ne.s32.totalorder %s111, %s114
      %p120 = scmp.eq.s32.totalorder %s17, 0
      %p121 = por %p119, %p120
      %p122 = scmp.ne.s32.totalorder %s111, %s114
      %p123 = scmp.eq.s32.totalorder %s22, 1
      %p124 = por %p122, %p123
      %p125 = scmp.ne.s32.totalorder %s114, %s115
      %p126 = scmp.eq.s32.totalorder %s22, 0
      %p127 = por %p125, %p126
      %p128 = scmp.ne.s32.totalorder %s114, %s115
      %p129 = scmp.eq.s32.totalorder %s23, 1
      %p130 = por %p128, %p129
      %p132 = scmp.ne.s32.totalorder %s115, %s131
      %p133 = scmp.eq.s32.totalorder %s23, 0
      %p134 = por %p132, %p133
      %s135 = ssub.s32 %s24, %s36
      %s136 = ssub.s32 %s25, %s32
      %s137 = sor.u32 %s135, %s136
      %p138 = scmp.eq.s32.totalorder %s137, 0
      %s140 = sadd.s32 %s139, 1
      %s141 = scalar_select %p138, %s139, %s140
      %p144 = pneg %p138
      %p145 = scmp.eq.s32.totalorder %s17, 1
      %p146 = por %p144, %p145
      %p147 = scmp.ne.s32.totalorder %s139, %s142
      %p148 = scmp.eq.s32.totalorder %s17, 0
      %p149 = por %p147, %p148
      %p150 = scmp.ne.s32.totalorder %s139, %s142
      %p151 = scmp.eq.s32.totalorder %s22, 1
      %p152 = por %p150, %p151
      %p153 = scmp.ne.s32.totalorder %s142, %s143
      %p154 = scmp.eq.s32.totalorder %s22, 0
      %p155 = por %p153, %p154
      %p156 = scmp.ne.s32.totalorder %s142, %s143
      %p157 = scmp.eq.s32.totalorder %s23, 1
      %p158 = por %p156, %p157
      %p160 = scmp.ne.s32.totalorder %s143, %s159
      %p161 = scmp.eq.s32.totalorder %s23, 0
      %p162 = por %p160, %p161
      %p163 = scmp.le.s32.totalorder 1, %s17
      %p164 = scmp.lt.s32.totalorder %s17, 3
      %p165 = pnand %p163, %p164
      %p166 = pneg %p165
      // Predicated region
      $region9: #{tpu_custom_call.1} parent=5 // pred_check
        _
      $region10: #{tpu_custom_call.1} parent=5 // pred_check_branch
        %168 = sbr.rel (%p165) target = $region12
      $region11: #{tpu_custom_call.1} parent=5 // pred_region
        %s169 = ssub.s32 %s17, 1
        // Predicated region
        $region13: #{tpu_custom_call.1} parent=11 // pred_check
          %p170 = pneg %p78
        $region14: #{tpu_custom_call.1} parent=11 // pred_check_branch
          %172 = sbr.rel (%p170) target = $region16
        $region15: #{tpu_custom_call.1} parent=11 // pred_region
          _
        $region16: #{tpu_custom_call.1} parent=11 // pred_fallthru
          _
        // Predicated region
        $region17: #{tpu_custom_call.1} parent=11 // pred_check
          %p173 = pneg %p99
        $region18: #{tpu_custom_call.1} parent=11 // pred_check_branch
          %175 = sbr.rel (%p173) target = $region20
        $region19: #{tpu_custom_call.1} parent=11 // pred_region
          _
        $region20: #{tpu_custom_call.1} parent=11 // pred_fallthru
          _
      $region12: #{tpu_custom_call.1} parent=5 // pred_fallthru
        _
      %p176 = scmp.lt.s32.totalorder %s17, 2
      // Predicated region
      $region21: #{tpu_custom_call.1} parent=5 // pred_check
        %p177 = pneg %p176
      $region22: #{tpu_custom_call.1} parent=5 // pred_check_branch
        %179 = sbr.rel (%p177) target = $region24
      $region23: #{tpu_custom_call.1} parent=5 // pred_region
        // Predicated region
        $region25: #{tpu_custom_call.1} parent=23 // pred_check
          %p180 = pneg %p51
        $region26: #{tpu_custom_call.1} parent=23 // pred_check_branch
          %182 = sbr.rel (%p180) target = $region28
        $region27: #{tpu_custom_call.1} parent=23 // pred_region
          %s183 = sand.u32 %s41, 1
          %s184 = scalar_lea.sflag [#allocation3], %s183
          %s185 = sand.u32 %s41, 1
          %s186 = smul.addr %s185, 64
          %s187 = scalar_lea.vmem [#allocation2], %s186
          %s188 = smul.u32 2, %s25
          %s190 = ssub.s32 1024, 1024
          %191 = vsyncadd %s184, %s190
          %s192 = smul.addr %s24, 8
          %s193 = sadd.s32 %s188, %s192
          %s194 = smul.addr %s193, 128
          %s195 = scalar_lea.hbm %s0, %s194
          %s196 = sshll.u32 %s187, 4
          %s197 = int_to_ptr.vmem [resolvable:$true] %s196
          %202 = dma.hbm_to_vmem [thread:$0]  %s195, 1024, %s197, %s184, 256, 256, 16
        $region28: #{tpu_custom_call.1} parent=23 // pred_fallthru
          _
      $region24: #{tpu_custom_call.1} parent=5 // pred_fallthru
        _
      %p203 = scmp.le.s32.totalorder 1, %s17
      %p204 = scmp.lt.s32.totalorder %s17, 3
      %p205 = pnand %p203, %p204
      %p206 = pneg %p205
      // Predicated region
      $region29: #{tpu_custom_call.1} parent=5 // pred_check
        _
      $region30: #{tpu_custom_call.1} parent=5 // pred_check_branch
        %208 = sbr.rel (%p205) target = $region32
      $region31: #{tpu_custom_call.1} parent=5 // pred_region
        %s209 = ssub.s32 %s17, 1
        %s210 = sand.u32 %s44, 1
        %s211 = scalar_lea.sflag [#allocation3], %s210
        %s212 = sand.u32 %s44, 1
        %s213 = smul.addr %s212, 64
        %s214 = scalar_lea.vmem [#allocation2], %s213
        // Predicated region
        $region33: #{tpu_custom_call.1} parent=31 // pred_check
          %p215 = pneg %p57
        $region34: #{tpu_custom_call.1} parent=31 // pred_check_branch
          %217 = sbr.rel (%p215) target = $region36
        $region35: #{tpu_custom_call.1} parent=31 // pred_region
          %218 = dma.done %s211, 1024
        $region36: #{tpu_custom_call.1} parent=31 // pred_fallthru
          _
        %s219 = sand.u32 %s44, 1
        %s220 = scalar_lea.sflag [#allocation3], %s219
        %s221 = sand.u32 %s44, 1
        %s222 = smul.addr %s221, 64
        %s223 = scalar_lea.vmem [#allocation2], %s222
        %p224 = pneg %p57
        %p225 = pneg %p54
        %p226 = pneg %p78
        %p227 = pneg %p75
        %p228 = pneg %p99
        %p229 = pneg %p96
        %p230 = pneg %p127
        %p231 = pneg %p124
        %s232 = sand.u32 %s114, 1
        %s233 = scalar_lea.sflag [#allocation4], %s232
        %s234 = sand.u32 %s114, 1
        %s235 = smul.addr %s234, 16
        %s236 = scalar_lea.vmem [#allocation5], %s235
        %p237 = pneg %p155
        %p238 = pneg %p152
        %s239 = smul.u32 2, %s27
        %p240 = scmp.lt.s32.totalorder %s26, 1
        %s241 = scalar_select %p240, %s26, 1
        %p242 = scmp.lt.s32.totalorder %s239, 1
        %s243 = scalar_select %p242, %s239, 1
        %s244 = smul.addr %s241, 14
        %s245 = sadd.s32 %s243, %s244
        %s246 = smul.addr %s245, 4
        %s247 = scalar_lea.vmem %s4, %s246
        %s248 = smul.u32 2, %s27
        %s249 = smul.u32 2, %s27
        %s250 = smul.u32 2, %s27
        %p251 = scmp.lt.s32.totalorder %s26, 1
        %s252 = scalar_select %p251, %s26, 1
        %p253 = scmp.lt.s32.totalorder %s250, 1
        %s254 = scalar_select %p253, %s250, 1
        %s255 = smul.addr %s252, 14
        %s256 = sadd.s32 %s254, %s255
        %s257 = smul.addr %s256, 4
        %s258 = scalar_lea.vmem %s4, %s257
        %s259 = smul.u32 2, %s27
        %v261 = vld [vmem:[%s214] sm:$0xff]
        %v262 = vld [vmem:[%s214 + $0x8] sm:$0xff]
        %v263 = vld [vmem:[%s214 + $0x10] sm:$0xff]
        %v264 = vld [vmem:[%s214 + $0x18] sm:$0xff]
        %v265 = vld [vmem:[%s214 + $0x20] sm:$0xff]
        %v266 = vld [vmem:[%s214 + $0x28] sm:$0xff]
        %v267 = vld [vmem:[%s214 + $0x30] sm:$0xff]
        %v268 = vld [vmem:[%s214 + $0x38] sm:$0xff]
        %v269 = vpack.c.bf16 %v263, %v261
        %v270 = vpack.c.bf16 %v264, %v262
        %v271 = vpack.c.bf16 %v267, %v265
        %v272 = vpack.c.bf16 %v268, %v266
        %v273 = vld [vmem:[%s1] sm:$0xf]
        %v274 = vld [vmem:[%s1 + $0x4] sm:$0xf]
        %v275 = vld [vmem:[%s1 + $0x8] sm:$0xf]
        %v276 = vld [vmem:[%s1 + $0xc] sm:$0xf]
        %v277 = vld [vmem:[%s1 + $0x10] sm:$0xf]
        %v278 = vld [vmem:[%s1 + $0x14] sm:$0xf]
        %v279 = vld [vmem:[%s1 + $0x18] sm:$0xf]
        %v280 = vld [vmem:[%s1 + $0x1c] sm:$0xf]
        %v281 = vld [vmem:[%s1 + $0x20] sm:$0x1]
        %v282 = vld [vmem:[%s2] sm:$0xff]
        %v283 = vld [vmem:[%s2 + $0x8] sm:$0xff]
        %v284 = vld [vmem:[%s2 + $0x10] sm:$0xff]
        %v285 = vld [vmem:[%s2 + $0x18] sm:$0xff]
        %v286 = vld [vmem:[%s2 + $0x20] sm:$0xff]
        %v287 = vld [vmem:[%s2 + $0x28] sm:$0xff]
        %v288 = vld [vmem:[%s2 + $0x30] sm:$0xff]
        %v289 = vld [vmem:[%s2 + $0x38] sm:$0xff]
        %v290 = vld [vmem:[%s2 + $0x40] sm:$0x1]
        %292 = vset.pattern.permute.xlu0 0
        %293 = vperm.xlu0 %292, %v282
        %v294 = vpop.permute.xlu0 %293
        %297 = vset.pattern.permute.xlu0 0
        %298 = vperm.xlu0 %297, %v283
        %v299 = vpop.permute.xlu0 %298
        %302 = vset.pattern.permute.xlu0 0
        %303 = vperm.xlu0 %302, %v284
        %v304 = vpop.permute.xlu0 %303
        %307 = vset.pattern.permute.xlu0 0
        %308 = vperm.xlu0 %307, %v285
        %v309 = vpop.permute.xlu0 %308
        %312 = vset.pattern.permute.xlu0 0
        %313 = vperm.xlu0 %312, %v286
        %v314 = vpop.permute.xlu0 %313
        %317 = vset.pattern.permute.xlu0 0
        %318 = vperm.xlu0 %317, %v287
        %v319 = vpop.permute.xlu0 %318
        %322 = vset.pattern.permute.xlu0 0
        %323 = vperm.xlu0 %322, %v288
        %v324 = vpop.permute.xlu0 %323
        %327 = vset.pattern.permute.xlu0 0
        %328 = vperm.xlu0 %327, %v289
        %v329 = vpop.permute.xlu0 %328
        %332 = vset.pattern.permute.xlu0 0
        %333 = vperm.xlu0 %332, %v290
        %v334 = vpop.permute.xlu0 %333
        %v345 = vunpack.c.l.b16 %v273
        %v346 = vunpack.c.l.b16 %v274
        %v347 = vunpack.c.l.b16 %v275
        %v348 = vunpack.c.l.b16 %v276
        %v349 = vunpack.c.l.b16 %v277
        %v350 = vunpack.c.l.b16 %v278
        %v351 = vunpack.c.l.b16 %v279
        %v352 = vunpack.c.l.b16 %v280
        %v353 = vunpack.c.l.b16 %v281
        %v354 = vpack.c.b16 %v346, %v345
        %v355 = vpack.c.b16 %v348, %v347
        %v356 = vpack.c.b16 %v350, %v349
        %v357 = vpack.c.b16 %v352, %v351
        %v358 = vpack.c.b16 %v353, %v353
        %vm359 = vcmask 261120
        %v361 = vsel %vm359, %v354, 0
        %v364 = vsel %vm359, %v355, 0
        %v367 = vsel %vm359, %v356, 0
        %v370 = vsel %vm359, %v357, 0
        %v373 = vsel %vm359, %v358, 0
        %375 = vmatprep.subr.bf16.mxu0 %v270
        %376 = vmatpush1.bf16.msra.mxu0 %v269
        %377 = vmatprep.subr.bf16.mxu0 %v272
        %378 = vmatpush1.bf16.msra.mxu0 %v271
        %379 = vmatprep.subr.bf16.mxu0 0
        %380 = vmatpush1.bf16.msra.mxu0 0
        %381 = vmatprep.subr.bf16.mxu0 0
        %382 = vmatpush1.bf16.msra.mxu0 0
        %383 = vmatprep.subr.bf16.mxu0 0
        %384 = vmatpush1.bf16.msra.mxu0 0
        %385 = vmatprep.subr.bf16.mxu0 0
        %386 = vmatpush1.bf16.msra.mxu0 0
        %387 = vmatprep.subr.bf16.mxu0 0
        %388 = vmatpush1.bf16.msra.mxu0 0
        %389 = vmatprep.subr.bf16.mxu0 0
        %390 = vmatpush1.bf16.msra.mxu0 0
        %391 = vmatprep.subr.bf16.mxu0 0
        %392 = vmatpush1.bf16.msra.mxu0 0
        %393 = vmatprep.subr.bf16.mxu0 0
        %394 = vmatpush1.bf16.msra.mxu0 0
        %395 = vmatprep.subr.bf16.mxu0 0
        %396 = vmatpush1.bf16.msra.mxu0 0
        %397 = vmatprep.subr.bf16.mxu0 0
        %398 = vmatpush1.bf16.msra.mxu0 0
        %399 = vmatprep.subr.bf16.mxu0 0
        %400 = vmatpush1.bf16.msra.mxu0 0
        %401 = vmatprep.subr.bf16.mxu0 0
        %402 = vmatpush1.bf16.msra.mxu0 0
        %403 = vmatprep.subr.bf16.mxu0 0
        %404 = vmatpush1.bf16.msra.mxu0 0
        %405 = vmatprep.subr.bf16.mxu0 0
        %406 = vmatpush1.bf16.msra.mxu0 0
        %407 = vmatprep.mubr.bf16.mxu0 0
        %408 = vmatmul.mubr.bf16.gmra.mrb[0].mxu0 %v361
        %v409 = vpop.f32.mrb[0].mxu0
        %v410 = vadd.f32 %v294, %v409
        %v411 = vpop.f32.mrb[0].mxu0
        %v412 = vadd.f32 %v294, %v411
        %v413 = vpop.f32.mrb[0].mxu0
        %v414 = vadd.f32 %v299, %v413
        %v415 = vpop.f32.mrb[0].mxu0
        %v416 = vadd.f32 %v299, %v415
        %417 = vmatprep.mubr.bf16.mxu0 0
        %418 = vmatmul.mubr.bf16.gmra.mrb[0].mxu0 %v364
        %v419 = vpop.f32.mrb[0].mxu0
        %v420 = vadd.f32 %v304, %v419
        %v421 = vpop.f32.mrb[0].mxu0
        %v422 = vadd.f32 %v304, %v421
        %v423 = vpop.f32.mrb[0].mxu0
        %v424 = vadd.f32 %v309, %v423
        %v425 = vpop.f32.mrb[0].mxu0
        %v426 = vadd.f32 %v309, %v425
        %427 = vmatprep.mubr.bf16.mxu0 0
        %428 = vmatmul.mubr.bf16.gmra.mrb[0].mxu0 %v367
        %v429 = vpop.f32.mrb[0].mxu0
        %v430 = vadd.f32 %v314, %v429
        %v431 = vpop.f32.mrb[0].mxu0
        %v432 = vadd.f32 %v314, %v431
        %v433 = vpop.f32.mrb[0].mxu0
        %v434 = vadd.f32 %v319, %v433
        %v435 = vpop.f32.mrb[0].mxu0
        %v436 = vadd.f32 %v319, %v435
        %437 = vmatprep.mubr.bf16.mxu0 0
        %438 = vmatmul.mubr.bf16.gmra.mrb[0].mxu0 %v370
        %v439 = vpop.f32.mrb[0].mxu0
        %v440 = vadd.f32 %v324, %v439
        %v441 = vpop.f32.mrb[0].mxu0
        %v442 = vadd.f32 %v324, %v441
        %v443 = vpop.f32.mrb[0].mxu0
        %v444 = vadd.f32 %v329, %v443
        %v445 = vpop.f32.mrb[0].mxu0
        %v446 = vadd.f32 %v329, %v445
        %447 = vmatprep.mubr.bf16.mxu0 0
        %448 = vmatmul.mubr.bf16.gmra.mrb[0].mxu0 %v373
        %v449 = vpop.f32.mrb[0].mxu0
        %v450 = vadd.f32 %v334, %v449
        %v451 = vpop.f32.mrb[0].mxu0
        %v452 = vadd.f32 %v334, %v451
        %v453 = vpop.f32.mrb[0].mxu0
        %v454 = vpop.f32.mrb[0].mxu0
        %455 = vdwg.mxu0
        %v456 = vpack.c.bf16 %v414, %v410
        %v457 = vpack.c.bf16 %v416, %v412
        %v460 = vunpack.c.l.b16 %v456
        %v461 = vunpack.c.l.b16 %v457
        %v462 = vunpack.c.h.b16 %v456
        %v463 = vunpack.c.h.b16 %v457
        %v464 = vpack.c.b16 %v461, %v460
        %v465 = vpack.c.b16 %v463, %v462
        %468 = vst [vmem:[%s236] sm:$0xff] %v464
        %469 = vst [vmem:[%s236 + $0x8] sm:$0xff] %v465
        %v470 = vpack.c.bf16 %v424, %v420
        %v471 = vpack.c.bf16 %v426, %v422
        %v472 = vpack.c.bf16 %v434, %v430
        %v473 = vpack.c.bf16 %v436, %v432
        %v474 = vpack.c.bf16 %v444, %v440
        %v475 = vpack.c.bf16 %v446, %v442
        %v476 = vpack.c.bf16 %v450, %v450
        %v477 = vpack.c.bf16 %v452, %v452
        %v486 = vunpack.c.l.b16 %v470
        %v487 = vunpack.c.l.b16 %v471
        %v488 = vunpack.c.h.b16 %v470
        %v489 = vunpack.c.h.b16 %v471
        %v490 = vunpack.c.l.b16 %v472
        %v491 = vunpack.c.l.b16 %v473
        %v492 = vunpack.c.h.b16 %v472
        %v493 = vunpack.c.h.b16 %v473
        %v494 = vunpack.c.l.b16 %v474
        %v495 = vunpack.c.l.b16 %v475
        %v496 = vunpack.c.h.b16 %v474
        %v497 = vunpack.c.h.b16 %v475
        %v498 = vunpack.c.l.b16 %v476
        %v499 = vunpack.c.l.b16 %v477
        %v500 = vpack.c.b16 %v487, %v486
        %v501 = vpack.c.b16 %v489, %v488
        %v502 = vpack.c.b16 %v491, %v490
        %v503 = vpack.c.b16 %v493, %v492
        %v504 = vpack.c.b16 %v495, %v494
        %v505 = vpack.c.b16 %v497, %v496
        %v506 = vpack.c.b16 %v499, %v498
        %514 = vst [vmem:[%s258] sm:$0xff] %v500
        %515 = vst [vmem:[%s258 + $0x8] sm:$0xff] %v501
        %516 = vst [vmem:[%s258 + $0x10] sm:$0xff] %v502
        %517 = vst [vmem:[%s258 + $0x18] sm:$0xff] %v503
        %518 = vst [vmem:[%s258 + $0x20] sm:$0xff] %v504
        %519 = vst [vmem:[%s258 + $0x28] sm:$0xff] %v505
        %vm520 = vcmask 1040384
        %vm521 = vsmask.f32 256
        %vm522 = vmand %vm520, %vm521
        %vm523 = vcmask 1044484
        %vm524 = vsmask.f32 4352
        %vm525 = vmand %vm523, %vm524
        %vm526 = vmor %vm525, %vm522
        %v527 = vld [vmem:[%s258 + $0x30] sm:$0x11]
        %v528 = vsel %vm526, %v506, %v527
        %529 = vst [vmem:[%s258 + $0x30] sm:$0x11] %v528
        %s530 = sand.u32 %s114, 1
        %s531 = scalar_lea.sflag [#allocation4], %s530
        %s532 = sand.u32 %s114, 1
        %s533 = smul.addr %s532, 16
        %s534 = scalar_lea.vmem [#allocation5], %s533
        %s535 = smul.u32 2, %s27
        %p536 = scmp.lt.s32.totalorder %s26, 1
        %s537 = scalar_select %p536, %s26, 1
        %p538 = scmp.lt.s32.totalorder %s535, 1
        %s539 = scalar_select %p538, %s535, 1
        %s540 = smul.addr %s537, 14
        %s541 = sadd.s32 %s539, %s540
        %s542 = smul.addr %s541, 4
        %s543 = scalar_lea.vmem %s4, %s542
        // Predicated region
        $region37: #{tpu_custom_call.1} parent=31 // pred_check
          %p544 = pneg %p124
        $region38: #{tpu_custom_call.1} parent=31 // pred_check_branch
          %546 = sbr.rel (%p544) target = $region40
        $region39: #{tpu_custom_call.1} parent=31 // pred_region
          %s547 = smul.u32 2, %s27
          %s549 = ssub.s32 256, 256
          %550 = vsyncadd %s531, %s549
          %s551 = smul.addr %s26, 4
          %s552 = sadd.s32 %s547, %s551
          %s553 = smul.addr %s552, 64
          %s554 = scalar_lea.hbm %s3, %s553
          %s555 = sshll.u32 %s534, 4
          %s556 = int_to_ptr.vmem [resolvable:$true] %s555
          %561 = dma.vmem_to_hbm [thread:$0]  %s556, 256, %s554, %s531, 128, 128, 8
        $region40: #{tpu_custom_call.1} parent=31 // pred_fallthru
          _
        // Predicated region
        $region41: #{tpu_custom_call.1} parent=31 // pred_check
          %p562 = pneg %p152
        $region42: #{tpu_custom_call.1} parent=31 // pred_check_branch
          %564 = sbr.rel (%p562) target = $region44
        $region43: #{tpu_custom_call.1} parent=31 // pred_region
          %s565 = smul.u32 2, %s27
        $region44: #{tpu_custom_call.1} parent=31 // pred_fallthru
          _
      $region32: #{tpu_custom_call.1} parent=5 // pred_fallthru
        _
      %p566 = scmp.le.s32.totalorder 2, %s17
      // Predicated region
      $region45: #{tpu_custom_call.1} parent=5 // pred_check
        %p567 = pneg %p566
      $region46: #{tpu_custom_call.1} parent=5 // pred_check_branch
        %569 = sbr.rel (%p567) target = $region48
      $region47: #{tpu_custom_call.1} parent=5 // pred_region
        %s570 = ssub.s32 %s17, 2
        // Predicated region
        $region49: #{tpu_custom_call.1} parent=47 // pred_check
          %p571 = pneg %p130
        $region50: #{tpu_custom_call.1} parent=47 // pred_check_branch
          %573 = sbr.rel (%p571) target = $region52
        $region51: #{tpu_custom_call.1} parent=47 // pred_region
          %s574 = sand.u32 %s115, 1
          %s575 = scalar_lea.sflag [#allocation4], %s574
          %s576 = sand.u32 %s115, 1
          %s577 = smul.addr %s576, 16
          %s578 = scalar_lea.vmem [#allocation5], %s577
          %579 = dma.done %s575, 256
        $region52: #{tpu_custom_call.1} parent=47 // pred_fallthru
          _
        // Predicated region
        $region53: #{tpu_custom_call.1} parent=47 // pred_check
          %p580 = pneg %p158
        $region54: #{tpu_custom_call.1} parent=47 // pred_check_branch
          %582 = sbr.rel (%p580) target = $region56
        $region55: #{tpu_custom_call.1} parent=47 // pred_region
          %s583 = smul.u32 2, %s29
          %p584 = scmp.lt.s32.totalorder %s28, 1
          %s585 = scalar_select %p584, %s28, 1
          %p586 = scmp.lt.s32.totalorder %s583, 1
          %s587 = scalar_select %p586, %s583, 1
          %s588 = smul.addr %s585, 14
          %s589 = sadd.s32 %s587, %s588
          %s590 = smul.addr %s589, 4
          %s591 = scalar_lea.vmem %s4, %s590
        $region56: #{tpu_custom_call.1} parent=47 // pred_fallthru
          _
      $region48: #{tpu_custom_call.1} parent=5 // pred_fallthru
        _
    $region6: #{tpu_custom_call.1} parent=1 // loop_footer
      %s21 = sadd.s32 1, %s17
    $region7: #{tpu_custom_call.1} parent=1 // loop_footer_branch
      %16 = sbr.rel target = $region3
    $region8: #{tpu_custom_call.1} parent=1 // loop_exit
      _
    %592 = vsyncpa [#allocation3], 1
    %s593 = scalar_lea.sflag [#allocation3], 1
    %594 = vsyncpa %s593, 1
    %595 = vsyncpa [#allocation4], 1
    %s596 = scalar_lea.sflag [#allocation4], 1
    %597 = vsyncpa %s596, 1

</llo_original>
